<compile_context>
chip_gen: v6e
topology: v6e:2x2x1
jax: 0.10.0
libtpu: 0.0.40
codegen_flags: <defaults>
</compile_context>

<pallas_src>
import functools

import jax
import jax.numpy as jnp
from jax.experimental import pallas as pl
from jax.experimental.pallas import tpu as pltpu


def _spatial_attn_kernel(w_ref, mask_ref, x_ref, o_ref,
                         sum_ref, max_ref, spad_ref, mpad_ref,
                         *, K, W, HW, P):
    # w_ref    : SMEM (2*K*K,) f32. taps 0..K*K-1   = avg-branch weights / C,
    #                               taps K*K..2K*K-1 = max-branch weights.
    # mask_ref : VMEM (K, HW) f32 column-edge validity masks (per dx = kx-K//2).
    # x_ref    : VMEM (Nb, Ct, HW) native dtype, lane-dense input block.
    # o_ref    : VMEM (Nb, HW) output block (lane-dense store).
    # sum_ref  : VMEM (Nb, HW) f32 running channel sum   (aligned, unpadded).
    # max_ref  : VMEM (Nb, HW) native running channel max (aligned, unpadded).
    # spad_ref / mpad_ref : VMEM (Nb, HW + 2P) f32 flat zero-halo maps,
    #                       touched only at the finalize step.
    c_idx = pl.program_id(1)
    n_c = pl.num_programs(1)

    # ---- hot path: partial channel reduction over this (Nb, Ct, HW) block ----
    xb = x_ref[...]                                  # (Nb, Ct, HW) native dtype
    s = jnp.sum(xb.astype(jnp.float32), axis=1)      # (Nb, HW) f32 partial sum
    m = jnp.max(xb, axis=1)                          # (Nb, HW) native partial max

    @pl.when(c_idx == 0)
    def _():
        sum_ref[...] = s
        max_ref[...] = m

    @pl.when(c_idx != 0)
    def _():
        sum_ref[...] = sum_ref[...] + s
        max_ref[...] = jnp.maximum(max_ref[...], m)

    # ---- finalize (once per N block): KxK "same" conv over [avg; max] + sigmoid ----
    @pl.when(c_idx == n_c - 1)
    def _():
        nb = spad_ref.shape[0]
        zero_halo = jnp.zeros((nb, P), jnp.float32)
        # Build the flat zero-halo maps once (never on the hot path).
        spad_ref[:, 0:P] = zero_halo
        spad_ref[:, P + HW:P + HW + P] = zero_halo
        spad_ref[:, P:P + HW] = sum_ref[...]
        mpad_ref[:, 0:P] = zero_halo
        mpad_ref[:, P + HW:P + HW + P] = zero_halo
        mpad_ref[:, P:P + HW] = max_ref[...].astype(jnp.float32)

        R = K // 2
        acc = None
        # K*K shifted slice loads; the 3 (K) ky taps of each kx are grouped so
        # each column-edge mask multiply happens once per group, not per tap.
        for kx in range(K):
            part = None
            for ky in range(K):
                st = P + (ky - R) * W + (kx - R)
                t = (w_ref[ky * K + kx] * spad_ref[:, st:st + HW]
                     + w_ref[K * K + ky * K + kx] * mpad_ref[:, st:st + HW])
                part = t if part is None else part + t
            if kx != R:                              # center column needs no mask
                part = part * mask_ref[kx:kx + 1, :]
            acc = part if acc is None else acc + part

        o_ref[...] = jax.nn.sigmoid(acc).astype(o_ref.dtype)


def _pick_blocks(N, C, HW, itemsize):
    """Choose (Nb, Ct): divisor block sizes whose *padded* footprint
    (sublane x 128-lane rounding, counted in f32-equivalent bytes so the
    in-kernel cast temp is covered) stays <= ~8 MiB.  Second-minor block dims
    are kept either full or a sublane multiple (the (8,128) BlockSpec rule)."""
    sub = {4: 8, 2: 16, 1: 32}.get(itemsize, 8)      # sublane granularity by dtype
    lanes = -(-HW // 128) * 128                       # lane padding to 128
    budget = 8 * 1024 * 1024                          # per block, f32-equivalent

    def f32_bytes(nb, ct):
        return nb * (-(-ct // sub) * sub) * lanes * 4

    def cands(n):
        return [d for d in range(1, n + 1)
                if n % d == 0 and (d == n or d % sub == 0)]

    ct_c = cands(C)
    fit = [d for d in ct_c if f32_bytes(1, d) <= budget]
    ct = max(fit) if fit else min(ct_c)               # fallback: smallest legal block

    nb_c = cands(N)
    fit = [d for d in nb_c if f32_bytes(d, ct) <= budget]
    nb = max(fit) if fit else min(nb_c)

    # Keep >= 2 N-parallel grid steps (feeds both v7x TensorCores) only when the
    # per-step block stays >= ~2 MiB: on single-TC v5e/v6e splitting a still
    # multi-MiB block costs ~nothing, and we never fragment into tiny blocks.
    if nb == N and N > 1:
        smaller = [d for d in nb_c if d < N and f32_bytes(d, ct) >= (2 << 20)]
        if smaller:
            nb = max(smaller)
    return nb, ct


def spatial_attention2(x, conv_weight):
    """x: (N, C, H, W); conv_weight: (1, 2, K, K), K odd.
    Returns sigmoid(conv2d([mean_c(x); max_c(x)])) of shape (N, 1, H, W)."""
    N, C, H, W = x.shape
    K = conv_weight.shape[-1]
    assert conv_weight.shape == (1, 2, K, K) and K % 2 == 1
    HW = H * W
    R = K // 2
    P = R * (W + 1)          # flat halo: covers the max |dy*W + dx| shift

    # Fold 1/C of the channel mean into the avg-branch taps (kernel only ever
    # needs the running channel *sum*).
    w = conv_weight.astype(jnp.float32)
    w_flat = jnp.concatenate([(w[0, 0] / C).reshape(-1),
                              w[0, 1].reshape(-1)])                     # (2*K*K,)

    # Column-edge validity masks for each horizontal tap offset dx = kx - R,
    # precomputed here so the kernel needs no iota/mod; DMA'd once (constant
    # block index) and reused across the whole grid.
    col = jnp.arange(HW, dtype=jnp.int32) % W
    masks = jnp.stack(
        [((col + (kx - R) >= 0) & (col + (kx - R) <= W - 1)) for kx in range(K)]
    ).astype(jnp.float32)                                               # (K, HW)

    x_flat = x.reshape(N, C, HW)      # free reshape: lane-dense, HBM contiguous

    itemsize = jnp.dtype(x.dtype).itemsize
    Nb, Ct = _pick_blocks(N, C, HW, itemsize)

    kernel = functools.partial(_spatial_attn_kernel, K=K, W=W, HW=HW, P=P)
    out = pl.pallas_call(
        kernel,
        out_shape=jax.ShapeDtypeStruct((N, HW), x.dtype),
        grid=(N // Nb, C // Ct),
        in_specs=[
            pl.BlockSpec(memory_space=pltpu.MemorySpace.SMEM),       # conv taps (scalars)
            pl.BlockSpec((K, HW), lambda n, c: (0, 0)),              # column-edge masks
            pl.BlockSpec((Nb, Ct, HW), lambda n, c: (n, c, 0)),      # lane-dense input block
        ],
        out_specs=pl.BlockSpec((Nb, HW), lambda n, c: (n, 0)),       # lane-dense output block
        scratch_shapes=[
            pltpu.VMEM((Nb, HW), jnp.float32),           # running channel sum (aligned)
            pltpu.VMEM((Nb, HW), x.dtype),               # running channel max (native dtype)
            pltpu.VMEM((Nb, HW + 2 * P), jnp.float32),   # zero-halo padded sum map (finalize)
            pltpu.VMEM((Nb, HW + 2 * P), jnp.float32),   # zero-halo padded max map (finalize)
        ],
        compiler_params=pltpu.CompilerParams(
            dimension_semantics=("parallel", "arbitrary"),
            vmem_limit_bytes=32 * 1024 * 1024),
    )(w_flat, masks, x_flat)
    return out.reshape(N, 1, H, W)


if __name__ == "__main__":
    key = jax.random.PRNGKey(0)
    k1, k2 = jax.random.split(key)
    x = jax.random.normal(k1, (2, 4, 16, 16), dtype=jnp.float32)
    # Deterministic synthetic Conv2d(2, 1, 3, padding=1, bias=False) weight.
    w = 0.1 * jax.random.normal(k2, (1, 2, 3, 3), dtype=jnp.float32)

    out = jax.block_until_ready(jax.jit(spatial_attention2)(x, w))

    # Plain-JAX reference for verification.
    avg = jnp.mean(x, axis=1, keepdims=True)
    mx = jnp.max(x, axis=1, keepdims=True)
    cat = jnp.concatenate([avg, mx], axis=1)
    ref = jax.lax.conv_general_dilated(
        cat, w, window_strides=(1, 1), padding="SAME",
        dimension_numbers=("NCHW", "OIHW", "NCHW"))
    ref = jax.nn.sigmoid(ref)

    assert out.shape == (2, 1, 16, 16)
    assert jnp.allclose(out, ref, atol=1e-5, rtol=1e-5)
    print("KERNEL_OK")
</pallas_src>

<mosaic_0001>
module attributes {stable_mosaic.version = 11 : i64} {
  func.func @_spatial_attn_kernel(%arg0: i32, %arg1: i32, %arg2: memref<18xf32, #tpu.memory_space<smem>>, %arg3: memref<3x256xf32, #tpu.memory_space<vmem>>, %arg4: memref<2x4x256xf32, #tpu.memory_space<vmem>>, %arg5: memref<2x256xf32, #tpu.memory_space<vmem>>, %arg6: memref<2x256xf32, #tpu.memory_space<vmem>>, %arg7: memref<2x256xf32, #tpu.memory_space<vmem>>, %arg8: memref<2x290xf32, #tpu.memory_space<vmem>>, %arg9: memref<2x290xf32, #tpu.memory_space<vmem>>) attributes {dimension_semantics = [#tpu.dimension_semantics<parallel>, #tpu.dimension_semantics<arbitrary>], iteration_bounds = array<i64: 1, 1>, scalar_prefetch = 0 : i64, scratch_operands = 4 : i64, tpu.core_type = #tpu.core_type<tc>, window_params = [{transform_indices = @transform_0, window_bounds = array<i64: 18>}, {pipeline_mode = #tpu.pipeline_mode<synchronous>, transform_indices = @transform_1, window_bounds = array<i64: 3, 256>}, {transform_indices = @transform_2, window_bounds = array<i64: 2, 4, 256>}, {transform_indices = @transform_3, window_bounds = array<i64: 2, 256>}]} {
    %c0 = arith.constant 0 : index
    %c0_0 = arith.constant 0 : index
    %c0_1 = arith.constant 0 : index
    %0 = vector.load %arg4[%c0, %c0_0, %c0_1] : memref<2x4x256xf32, #tpu.memory_space<vmem>>, vector<2x4x256xf32>
    %cst = arith.constant dense<0.000000e+00> : vector<2x256xf32>
    %1 = vector.multi_reduction <add>, %0, %cst [1] : vector<2x4x256xf32> to vector<2x256xf32>
    %cst_2 = arith.constant dense<0xFF800000> : vector<2x256xf32>
    %2 = vector.multi_reduction <maximumf>, %0, %cst_2 [1] : vector<2x4x256xf32> to vector<2x256xf32>
    %c0_i32 = arith.constant 0 : i32
    %3 = arith.cmpi eq, %arg1, %c0_i32 : i32
    %4 = arith.extui %3 : i1 to i32
    %c0_i32_3 = arith.constant 0 : i32
    %5 = arith.cmpi ne, %4, %c0_i32_3 : i32
    scf.if %5 {
      %c0_8 = arith.constant 0 : index
      %c0_9 = arith.constant 0 : index
      %12 = vector.load %arg6[%c0_8, %c0_9] : memref<2x256xf32, #tpu.memory_space<vmem>>, vector<2x256xf32>
      tpu.vector_store %arg6[%c0_8, %c0_9], %1 {strides = array<i32>} : memref<2x256xf32, #tpu.memory_space<vmem>>, vector<2x256xf32>,
      %c0_10 = arith.constant 0 : index
      %c0_11 = arith.constant 0 : index
      %13 = vector.load %arg7[%c0_10, %c0_11] : memref<2x256xf32, #tpu.memory_space<vmem>>, vector<2x256xf32>
      tpu.vector_store %arg7[%c0_10, %c0_11], %2 {strides = array<i32>} : memref<2x256xf32, #tpu.memory_space<vmem>>, vector<2x256xf32>,
    } else {
    }
    %c0_i32_4 = arith.constant 0 : i32
    %6 = arith.cmpi ne, %arg1, %c0_i32_4 : i32
    %7 = arith.extui %6 : i1 to i32
    %c0_i32_5 = arith.constant 0 : i32
    %8 = arith.cmpi ne, %7, %c0_i32_5 : i32
    scf.if %8 {
      %c0_8 = arith.constant 0 : index
      %c0_9 = arith.constant 0 : index
      %12 = vector.load %arg6[%c0_8, %c0_9] : memref<2x256xf32, #tpu.memory_space<vmem>>, vector<2x256xf32>
      %13 = arith.addf %12, %1 : vector<2x256xf32>
      %c0_10 = arith.constant 0 : index
      %c0_11 = arith.constant 0 : index
      %14 = vector.load %arg6[%c0_10, %c0_11] : memref<2x256xf32, #tpu.memory_space<vmem>>, vector<2x256xf32>
      tpu.vector_store %arg6[%c0_10, %c0_11], %13 {strides = array<i32>} : memref<2x256xf32, #tpu.memory_space<vmem>>, vector<2x256xf32>,
      %c0_12 = arith.constant 0 : index
      %c0_13 = arith.constant 0 : index
      %15 = vector.load %arg7[%c0_12, %c0_13] : memref<2x256xf32, #tpu.memory_space<vmem>>, vector<2x256xf32>
      %16 = arith.maximumf %15, %2 : vector<2x256xf32>
      %c0_14 = arith.constant 0 : index
      %c0_15 = arith.constant 0 : index
      %17 = vector.load %arg7[%c0_14, %c0_15] : memref<2x256xf32, #tpu.memory_space<vmem>>, vector<2x256xf32>
      tpu.vector_store %arg7[%c0_14, %c0_15], %16 {strides = array<i32>} : memref<2x256xf32, #tpu.memory_space<vmem>>, vector<2x256xf32>,
    } else {
    }
    %c0_i32_6 = arith.constant 0 : i32
    %9 = arith.cmpi eq, %arg1, %c0_i32_6 : i32
    %10 = arith.extui %9 : i1 to i32
    %c0_i32_7 = arith.constant 0 : i32
    %11 = arith.cmpi ne, %10, %c0_i32_7 : i32
    scf.if %11 {
      %cst_8 = arith.constant 0.000000e+00 : f32
      %12 = vector.broadcast %cst_8 : f32 to vector<2x17xf32>
      %c0_9 = arith.constant 0 : index
      %c0_10 = arith.constant 0 : index
      %13 = vector.load %arg8[%c0_9, %c0_10] : memref<2x290xf32, #tpu.memory_space<vmem>>, vector<2x17xf32>
      tpu.vector_store %arg8[%c0_9, %c0_10], %12 {strides = array<i32>} : memref<2x290xf32, #tpu.memory_space<vmem>>, vector<2x17xf32>,
      %c0_11 = arith.constant 0 : index
      %c273 = arith.constant 273 : index
      %14 = vector.load %arg8[%c0_11, %c273] : memref<2x290xf32, #tpu.memory_space<vmem>>, vector<2x17xf32>
      tpu.vector_store %arg8[%c0_11, %c273], %12 {strides = array<i32>} : memref<2x290xf32, #tpu.memory_space<vmem>>, vector<2x17xf32>,
      %c0_12 = arith.constant 0 : index
      %c0_13 = arith.constant 0 : index
      %15 = vector.load %arg6[%c0_12, %c0_13] : memref<2x256xf32, #tpu.memory_space<vmem>>, vector<2x256xf32>
      %c0_14 = arith.constant 0 : index
      %c17 = arith.constant 17 : index
      %16 = vector.load %arg8[%c0_14, %c17] : memref<2x290xf32, #tpu.memory_space<vmem>>, vector<2x256xf32>
      tpu.vector_store %arg8[%c0_14, %c17], %15 {strides = array<i32>} : memref<2x290xf32, #tpu.memory_space<vmem>>, vector<2x256xf32>,
      %c0_15 = arith.constant 0 : index
      %c0_16 = arith.constant 0 : index
      %17 = vector.load %arg9[%c0_15, %c0_16] : memref<2x290xf32, #tpu.memory_space<vmem>>, vector<2x17xf32>
      tpu.vector_store %arg9[%c0_15, %c0_16], %12 {strides = array<i32>} : memref<2x290xf32, #tpu.memory_space<vmem>>, vector<2x17xf32>,
      %c0_17 = arith.constant 0 : index
      %c273_18 = arith.constant 273 : index
      %18 = vector.load %arg9[%c0_17, %c273_18] : memref<2x290xf32, #tpu.memory_space<vmem>>, vector<2x17xf32>
      tpu.vector_store %arg9[%c0_17, %c273_18], %12 {strides = array<i32>} : memref<2x290xf32, #tpu.memory_space<vmem>>, vector<2x17xf32>,
      %c0_19 = arith.constant 0 : index
      %c0_20 = arith.constant 0 : index
      %19 = vector.load %arg7[%c0_19, %c0_20] : memref<2x256xf32, #tpu.memory_space<vmem>>, vector<2x256xf32>
      %c0_21 = arith.constant 0 : index
      %c17_22 = arith.constant 17 : index
      %20 = vector.load %arg9[%c0_21, %c17_22] : memref<2x290xf32, #tpu.memory_space<vmem>>, vector<2x256xf32>
      tpu.vector_store %arg9[%c0_21, %c17_22], %19 {strides = array<i32>} : memref<2x290xf32, #tpu.memory_space<vmem>>, vector<2x256xf32>,
      %c0_23 = arith.constant 0 : index
      %21 = memref.load %arg2[%c0_23] : memref<18xf32, #tpu.memory_space<smem>>
      %c0_24 = arith.constant 0 : index
      %c0_25 = arith.constant 0 : index
      %22 = vector.load %arg8[%c0_24, %c0_25] : memref<2x290xf32, #tpu.memory_space<vmem>>, vector<2x256xf32>
      %23 = vector.broadcast %21 : f32 to vector<2x256xf32>
      %24 = arith.mulf %23, %22 : vector<2x256xf32>
      %c9 = arith.constant 9 : index
      %25 = memref.load %arg2[%c9] : memref<18xf32, #tpu.memory_space<smem>>
      %c0_26 = arith.constant 0 : index
      %c0_27 = arith.constant 0 : index
      %26 = vector.load %arg9[%c0_26, %c0_27] : memref<2x290xf32, #tpu.memory_space<vmem>>, vector<2x256xf32>
      %27 = vector.broadcast %25 : f32 to vector<2x256xf32>
      %28 = arith.mulf %27, %26 : vector<2x256xf32>
      %29 = arith.addf %24, %28 : vector<2x256xf32>
      %c3 = arith.constant 3 : index
      %30 = memref.load %arg2[%c3] : memref<18xf32, #tpu.memory_space<smem>>
      %c0_28 = arith.constant 0 : index
      %c16 = arith.constant 16 : index
      %31 = vector.load %arg8[%c0_28, %c16] : memref<2x290xf32, #tpu.memory_space<vmem>>, vector<2x256xf32>
      %32 = vector.broadcast %30 : f32 to vector<2x256xf32>
      %33 = arith.mulf %32, %31 : vector<2x256xf32>
      %c12 = arith.constant 12 : index
      %34 = memref.load %arg2[%c12] : memref<18xf32, #tpu.memory_space<smem>>
      %c0_29 = arith.constant 0 : index
      %c16_30 = arith.constant 16 : index
      %35 = vector.load %arg9[%c0_29, %c16_30] : memref<2x290xf32, #tpu.memory_space<vmem>>, vector<2x256xf32>
      %36 = vector.broadcast %34 : f32 to vector<2x256xf32>
      %37 = arith.mulf %36, %35 : vector<2x256xf32>
      %38 = arith.addf %33, %37 : vector<2x256xf32>
      %39 = arith.addf %29, %38 : vector<2x256xf32>
      %c6 = arith.constant 6 : index
      %40 = memref.load %arg2[%c6] : memref<18xf32, #tpu.memory_space<smem>>
      %c0_31 = arith.constant 0 : index
      %c32 = arith.constant 32 : index
      %41 = vector.load %arg8[%c0_31, %c32] : memref<2x290xf32, #tpu.memory_space<vmem>>, vector<2x256xf32>
      %42 = vector.broadcast %40 : f32 to vector<2x256xf32>
      %43 = arith.mulf %42, %41 : vector<2x256xf32>
      %c15 = arith.constant 15 : index
      %44 = memref.load %arg2[%c15] : memref<18xf32, #tpu.memory_space<smem>>
      %c0_32 = arith.constant 0 : index
      %c32_33 = arith.constant 32 : index
      %45 = vector.load %arg9[%c0_32, %c32_33] : memref<2x290xf32, #tpu.memory_space<vmem>>, vector<2x256xf32>
      %46 = vector.broadcast %44 : f32 to vector<2x256xf32>
      %47 = arith.mulf %46, %45 : vector<2x256xf32>
      %48 = arith.addf %43, %47 : vector<2x256xf32>
      %49 = arith.addf %39, %48 : vector<2x256xf32>
      %c0_34 = arith.constant 0 : index
      %c0_35 = arith.constant 0 : index
      %50 = vector.load %arg3[%c0_34, %c0_35] : memref<3x256xf32, #tpu.memory_space<vmem>>, vector<1x256xf32>
      %51 = vector.broadcast %50 : vector<1x256xf32> to vector<2x256xf32>
      %52 = arith.mulf %49, %51 : vector<2x256xf32>
      %c1 = arith.constant 1 : index
      %53 = memref.load %arg2[%c1] : memref<18xf32, #tpu.memory_space<smem>>
      %c0_36 = arith.constant 0 : index
      %c1_37 = arith.constant 1 : index
      %54 = vector.load %arg8[%c0_36, %c1_37] : memref<2x290xf32, #tpu.memory_space<vmem>>, vector<2x256xf32>
      %55 = vector.broadcast %53 : f32 to vector<2x256xf32>
      %56 = arith.mulf %55, %54 : vector<2x256xf32>
      %c10 = arith.constant 10 : index
      %57 = memref.load %arg2[%c10] : memref<18xf32, #tpu.memory_space<smem>>
      %c0_38 = arith.constant 0 : index
      %c1_39 = arith.constant 1 : index
      %58 = vector.load %arg9[%c0_38, %c1_39] : memref<2x290xf32, #tpu.memory_space<vmem>>, vector<2x256xf32>
      %59 = vector.broadcast %57 : f32 to vector<2x256xf32>
      %60 = arith.mulf %59, %58 : vector<2x256xf32>
      %61 = arith.addf %56, %60 : vector<2x256xf32>
      %c4 = arith.constant 4 : index
      %62 = memref.load %arg2[%c4] : memref<18xf32, #tpu.memory_space<smem>>
      %c0_40 = arith.constant 0 : index
      %c17_41 = arith.constant 17 : index
      %63 = vector.load %arg8[%c0_40, %c17_41] : memref<2x290xf32, #tpu.memory_space<vmem>>, vector<2x256xf32>
      %64 = vector.broadcast %62 : f32 to vector<2x256xf32>
      %65 = arith.mulf %64, %63 : vector<2x256xf32>
      %c13 = arith.constant 13 : index
      %66 = memref.load %arg2[%c13] : memref<18xf32, #tpu.memory_space<smem>>
      %c0_42 = arith.constant 0 : index
      %c17_43 = arith.constant 17 : index
      %67 = vector.load %arg9[%c0_42, %c17_43] : memref<2x290xf32, #tpu.memory_space<vmem>>, vector<2x256xf32>
      %68 = vector.broadcast %66 : f32 to vector<2x256xf32>
      %69 = arith.mulf %68, %67 : vector<2x256xf32>
      %70 = arith.addf %65, %69 : vector<2x256xf32>
      %71 = arith.addf %61, %70 : vector<2x256xf32>
      %c7 = arith.constant 7 : index
      %72 = memref.load %arg2[%c7] : memref<18xf32, #tpu.memory_space<smem>>
      %c0_44 = arith.constant 0 : index
      %c33 = arith.constant 33 : index
      %73 = vector.load %arg8[%c0_44, %c33] : memref<2x290xf32, #tpu.memory_space<vmem>>, vector<2x256xf32>
      %74 = vector.broadcast %72 : f32 to vector<2x256xf32>
      %75 = arith.mulf %74, %73 : vector<2x256xf32>
      %c16_45 = arith.constant 16 : index
      %76 = memref.load %arg2[%c16_45] : memref<18xf32, #tpu.memory_space<smem>>
      %c0_46 = arith.constant 0 : index
      %c33_47 = arith.constant 33 : index
      %77 = vector.load %arg9[%c0_46, %c33_47] : memref<2x290xf32, #tpu.memory_space<vmem>>, vector<2x256xf32>
      %78 = vector.broadcast %76 : f32 to vector<2x256xf32>
      %79 = arith.mulf %78, %77 : vector<2x256xf32>
      %80 = arith.addf %75, %79 : vector<2x256xf32>
      %81 = arith.addf %71, %80 : vector<2x256xf32>
      %82 = arith.addf %52, %81 : vector<2x256xf32>
      %c2 = arith.constant 2 : index
      %83 = memref.load %arg2[%c2] : memref<18xf32, #tpu.memory_space<smem>>
      %c0_48 = arith.constant 0 : index
      %c2_49 = arith.constant 2 : index
      %84 = vector.load %arg8[%c0_48, %c2_49] : memref<2x290xf32, #tpu.memory_space<vmem>>, vector<2x256xf32>
      %85 = vector.broadcast %83 : f32 to vector<2x256xf32>
      %86 = arith.mulf %85, %84 : vector<2x256xf32>
      %c11 = arith.constant 11 : index
      %87 = memref.load %arg2[%c11] : memref<18xf32, #tpu.memory_space<smem>>
      %c0_50 = arith.constant 0 : index
      %c2_51 = arith.constant 2 : index
      %88 = vector.load %arg9[%c0_50, %c2_51] : memref<2x290xf32, #tpu.memory_space<vmem>>, vector<2x256xf32>
      %89 = vector.broadcast %87 : f32 to vector<2x256xf32>
      %90 = arith.mulf %89, %88 : vector<2x256xf32>
      %91 = arith.addf %86, %90 : vector<2x256xf32>
      %c5 = arith.constant 5 : index
      %92 = memref.load %arg2[%c5] : memref<18xf32, #tpu.memory_space<smem>>
      %c0_52 = arith.constant 0 : index
      %c18 = arith.constant 18 : index
      %93 = vector.load %arg8[%c0_52, %c18] : memref<2x290xf32, #tpu.memory_space<vmem>>, vector<2x256xf32>
      %94 = vector.broadcast %92 : f32 to vector<2x256xf32>
      %95 = arith.mulf %94, %93 : vector<2x256xf32>
      %c14 = arith.constant 14 : index
      %96 = memref.load %arg2[%c14] : memref<18xf32, #tpu.memory_space<smem>>
      %c0_53 = arith.constant 0 : index
      %c18_54 = arith.constant 18 : index
      %97 = vector.load %arg9[%c0_53, %c18_54] : memref<2x290xf32, #tpu.memory_space<vmem>>, vector<2x256xf32>
      %98 = vector.broadcast %96 : f32 to vector<2x256xf32>
      %99 = arith.mulf %98, %97 : vector<2x256xf32>
      %100 = arith.addf %95, %99 : vector<2x256xf32>
      %101 = arith.addf %91, %100 : vector<2x256xf32>
      %c8 = arith.constant 8 : index
      %102 = memref.load %arg2[%c8] : memref<18xf32, #tpu.memory_space<smem>>
      %c0_55 = arith.constant 0 : index
      %c34 = arith.constant 34 : index
      %103 = vector.load %arg8[%c0_55, %c34] : memref<2x290xf32, #tpu.memory_space<vmem>>, vector<2x256xf32>
      %104 = vector.broadcast %102 : f32 to vector<2x256xf32>
      %105 = arith.mulf %104, %103 : vector<2x256xf32>
      %c17_56 = arith.constant 17 : index
      %106 = memref.load %arg2[%c17_56] : memref<18xf32, #tpu.memory_space<smem>>
      %c0_57 = arith.constant 0 : index
      %c34_58 = arith.constant 34 : index
      %107 = vector.load %arg9[%c0_57, %c34_58] : memref<2x290xf32, #tpu.memory_space<vmem>>, vector<2x256xf32>
      %108 = vector.broadcast %106 : f32 to vector<2x256xf32>
      %109 = arith.mulf %108, %107 : vector<2x256xf32>
      %110 = arith.addf %105, %109 : vector<2x256xf32>
      %111 = arith.addf %101, %110 : vector<2x256xf32>
      %c2_59 = arith.constant 2 : index
      %c0_60 = arith.constant 0 : index
      %112 = vector.load %arg3[%c2_59, %c0_60] : memref<3x256xf32, #tpu.memory_space<vmem>>, vector<1x256xf32>
      %113 = vector.broadcast %112 : vector<1x256xf32> to vector<2x256xf32>
      %114 = arith.mulf %111, %113 : vector<2x256xf32>
      %115 = arith.addf %82, %114 : vector<2x256xf32>
      %116 = arith.negf %115 : vector<2x256xf32>
      %117 = math.exp %116 : vector<2x256xf32>
      %cst_61 = arith.constant 1.000000e+00 : f32
      %118 = vector.broadcast %cst_61 : f32 to vector<2x256xf32>
      %119 = arith.addf %118, %117 : vector<2x256xf32>
      %120 = arith.divf %118, %119 : vector<2x256xf32>
      %c0_62 = arith.constant 0 : index
      %c0_63 = arith.constant 0 : index
      %121 = vector.load %arg5[%c0_62, %c0_63] : memref<2x256xf32, #tpu.memory_space<vmem>>, vector<2x256xf32>
      tpu.vector_store %arg5[%c0_62, %c0_63], %120 {strides = array<i32>} : memref<2x256xf32, #tpu.memory_space<vmem>>, vector<2x256xf32>,
    } else {
    }
    return
  }
  func.func @transform_0(%arg0: i32, %arg1: i32) -> i32 {
    %c0_i32 = arith.constant 0 : i32
    %c0_i32_0 = arith.constant 0 : i32
    return %c0_i32 : i32
  }
  func.func @transform_1(%arg0: i32, %arg1: i32) -> (i32, i32) {
    %c0_i32 = arith.constant 0 : i32
    %c0_i32_0 = arith.constant 0 : i32
    %c0_i32_1 = arith.constant 0 : i32
    return %c0_i32, %c0_i32_0 : i32, i32
  }
  func.func @transform_2(%arg0: i32, %arg1: i32) -> (i32, i32, i32) {
    %c0_i32 = arith.constant 0 : i32
    %c0_i32_0 = arith.constant 0 : i32
    return %arg0, %arg1, %c0_i32 : i32, i32, i32
  }
  func.func @transform_3(%arg0: i32, %arg1: i32) -> (i32, i32) {
    %c0_i32 = arith.constant 0 : i32
    %c0_i32_0 = arith.constant 0 : i32
    return %arg0, %c0_i32 : i32, i32
  }
}

</mosaic_0001>

<llo_original>
// kernel: spatial_attention2.1
$region0: #{spatial_attention2.1}
  #allocation0 [shape = 'u32[]', space=smem, size = 0x4, offset = 0x4, fixed_abs, tag = 'smem constant byte address 0x4 - core index']
  #allocation1 [shape = 'u32[144,128]{1,0:T(1,128)}', space=vmem, size = 0x12000, scoped, tag = 'internal scratch']
  #allocation2 [shape = 'f32[2,256]{1,0:T(2,128)}', space=vmem, size = 0x800, scoped, tag = 'scratch operand']
  #allocation3 [shape = 'f32[2,256]{1,0:T(2,128)}', space=vmem, size = 0x800, scoped, tag = 'scratch operand']
  #allocation4 [shape = 'f32[2,290]{1,0:T(2,128)}', space=vmem, size = 0xc00, scoped, tag = 'scratch operand']
  #allocation5 [shape = 'f32[2,290]{1,0:T(2,128)}', space=vmem, size = 0xc00, scoped, tag = 'scratch operand']
  %s0 = inlined_call_operand.vmem [shape: f32[18], index: 0, kind: input, shape index: {}]
  %s1 = inlined_call_operand.vmem [shape: f32[3,256], index: 1, kind: input, shape index: {}]
  %s2 = inlined_call_operand.vmem [shape: f32[2,4,256], index: 2, kind: input, shape index: {}]
  %s3 = inlined_call_operand.vmem [shape: f32[2,256], index: 3, kind: output, shape index: {}]
  %s4 = sld [smem:[#allocation0]]
  $region38: #{spatial_attention2.1} parent=0
    _
  %s6 = ssub.s32 1, %s4
  %s7 = scalar_select 0, %s6, %s4
  $region1: #{spatial_attention2.1} parent=0
    #allocation6 [shape = 'u8[512]{0}', space=smem, size = 0x200, scoped, tag = 'input window, operand 0, single buffered']
    #allocation7 [shape = 's32[1]{0}', space=sflag, size = 0x4, scoped, tag = 'scoped memory for spatial_attention2.1']
    %8 = vsyncpa [#allocation7], 0
    // Predicated region
    $region2: #{spatial_attention2.1} parent=1 // pred_check
      _
    $region3: #{spatial_attention2.1} parent=1 // pred_check_branch
      %10 = sbr.rel (0) target = $region5
    $region4: #{spatial_attention2.1} parent=1 // pred_region
      %s12 = ssub.s32 16, 16
      %13 = vsyncadd [#allocation7], %s12
      %s15 = sshll.u32 %s0, 4
      %s16 = int_to_ptr.vmem [resolvable:$true] %s15
      %18 = dma.vmem_to_smem %s16, 16, [#allocation6], [#allocation7]
    $region5: #{spatial_attention2.1} parent=1 // pred_fallthru
      _
    // Predicated region
    $region6: #{spatial_attention2.1} parent=1 // pred_check
      _
    $region7: #{spatial_attention2.1} parent=1 // pred_check_branch
      %20 = sbr.rel (0) target = $region9
    $region8: #{spatial_attention2.1} parent=1 // pred_region
      _
    $region9: #{spatial_attention2.1} parent=1 // pred_fallthru
      _
    // Predicated region
    $region10: #{spatial_attention2.1} parent=1 // pred_check
      _
    $region11: #{spatial_attention2.1} parent=1 // pred_check_branch
      %22 = sbr.rel (0) target = $region13
    $region12: #{spatial_attention2.1} parent=1 // pred_region
      _
    $region13: #{spatial_attention2.1} parent=1 // pred_fallthru
      _
    // Predicated region
    $region14: #{spatial_attention2.1} parent=1 // pred_check
      _
    $region15: #{spatial_attention2.1} parent=1 // pred_check_branch
      %24 = sbr.rel (0) target = $region17
    $region16: #{spatial_attention2.1} parent=1 // pred_region
      %25 = dma.done [#allocation7], 16
    $region17: #{spatial_attention2.1} parent=1 // pred_fallthru
      _
    %26 = sfence
    %v27 = vld [vmem:[%s2] sm:$0xff]
    %v28 = vld [vmem:[%s2 + $0x8] sm:$0xff]
    %v31 = vcombine.high %v27, %v27
    %v32 = vcombine.high %v28, %v28
    %vm35 = vcmask 1043456
    %v36 = vsel %vm35, %v27, 0.0
    %v37 = vrot.slane %v36, 4
    %v38 = vadd.f32 %v36, %v37
    %v39 = vrot.slane %v38, 2
    %v40 = vadd.f32 %v38, %v39
    %v41 = vrot.slane %v40, 1
    %v42 = vadd.f32 %v40, %v41
    %v43 = vsel %vm35, %v31, 0.0
    %v44 = vrot.slane %v43, 4
    %v45 = vadd.f32 %v43, %v44
    %v46 = vrot.slane %v45, 2
    %v47 = vadd.f32 %v45, %v46
    %v48 = vrot.slane %v47, 1
    %v49 = vadd.f32 %v47, %v48
    %v50 = vsel %vm35, %v28, 0.0
    %v51 = vrot.slane %v50, 4
    %v52 = vadd.f32 %v50, %v51
    %v53 = vrot.slane %v52, 2
    %v54 = vadd.f32 %v52, %v53
    %v55 = vrot.slane %v54, 1
    %v56 = vadd.f32 %v54, %v55
    %v57 = vsel %vm35, %v32, 0.0
    %v58 = vrot.slane %v57, 4
    %v59 = vadd.f32 %v57, %v58
    %v60 = vrot.slane %v59, 2
    %v61 = vadd.f32 %v59, %v60
    %v62 = vrot.slane %v61, 1
    %v63 = vadd.f32 %v61, %v62
    %v64 = vsel %vm35, %v27, -inf
    %v65 = vrot.slane %v64, 4
    %v66 = vmax.f32 %v64, %v65
    %v67 = vrot.slane %v66, 2
    %v68 = vmax.f32 %v66, %v67
    %v69 = vrot.slane %v68, 1
    %v70 = vmax.f32 %v68, %v69
    %v71 = vsel %vm35, %v31, -inf
    %v72 = vrot.slane %v71, 4
    %v73 = vmax.f32 %v71, %v72
    %v74 = vrot.slane %v73, 2
    %v75 = vmax.f32 %v73, %v74
    %v76 = vrot.slane %v75, 1
    %v77 = vmax.f32 %v75, %v76
    %v78 = vsel %vm35, %v28, -inf
    %v79 = vrot.slane %v78, 4
    %v80 = vmax.f32 %v78, %v79
    %v81 = vrot.slane %v80, 2
    %v82 = vmax.f32 %v80, %v81
    %v83 = vrot.slane %v82, 1
    %v84 = vmax.f32 %v82, %v83
    %v85 = vsel %vm35, %v32, -inf
    %v86 = vrot.slane %v85, 4
    %v87 = vmax.f32 %v85, %v86
    %v88 = vrot.slane %v87, 2
    %v89 = vmax.f32 %v87, %v88
    %v90 = vrot.slane %v89, 1
    %v91 = vmax.f32 %v89, %v90
    %p92 = scmp.eq.s32.totalorder 0, 0
    // Predicated region
    $region18: #{spatial_attention2.1} parent=1 // pred_check
      %p93 = pneg %p92
    $region19: #{spatial_attention2.1} parent=1 // pred_check_branch
      %95 = sbr.rel (%p93) target = $region21
    $region20: #{spatial_attention2.1} parent=1 // pred_region
      %v100 = vcombine.low %v42, %v49
      %v102 = vunpack.c.l.s4 1983009808
      %v103 = vunpack.c.0.s8 %v102
      %v104 = vlaneseq
      %v105 = vshrl.u32 %v104, 7
      %v106 = vsub.s32 %v103, %v105
      %v107 = vrot.slane %v100, %v106
      %v108 = vcombine.low %v56, %v63
      %v110 = vunpack.c.l.s4 1983009808
      %v111 = vunpack.c.0.s8 %v110
      %v112 = vlaneseq
      %v113 = vshrl.u32 %v112, 7
      %v114 = vsub.s32 %v111, %v113
      %v115 = vrot.slane %v108, %v114
      %vm116 = vcmask 1044484
      %v117 = vsel %vm116, %v107, %v107
      %vm118 = vcmask 1046534
      %v119 = vsel %vm118, %v107, %v117
      %v120 = vrot.slane %v115, 7
      %vm121 = vcmask 1041409
      %v122 = vsel %vm121, %v120, %v119
      %vm123 = vcmask 1043459
      %v124 = vsel %vm123, %v120, %v122
      %vm125 = vcmask 1045509
      %v126 = vsel %vm125, %v120, %v124
      %vm127 = vcmask 1047559
      %v128 = vsel %vm127, %v120, %v126
      %130 = vst [vmem:[#allocation2] sm:$0xf] %v128
      %v135 = vcombine.low %v70, %v77
      %v137 = vunpack.c.l.s4 1983009808
      %v138 = vunpack.c.0.s8 %v137
      %v139 = vlaneseq
      %v140 = vshrl.u32 %v139, 7
      %v141 = vsub.s32 %v138, %v140
      %v142 = vrot.slane %v135, %v141
      %v143 = vcombine.low %v84, %v91
      %v145 = vunpack.c.l.s4 1983009808
      %v146 = vunpack.c.0.s8 %v145
      %v147 = vlaneseq
      %v148 = vshrl.u32 %v147, 7
      %v149 = vsub.s32 %v146, %v148
      %v150 = vrot.slane %v143, %v149
      %v151 = vsel %vm116, %v142, %v142
      %v152 = vsel %vm118, %v142, %v151
      %v153 = vrot.slane %v150, 7
      %v154 = vsel %vm121, %v153, %v152
      %v155 = vsel %vm123, %v153, %v154
      %v156 = vsel %vm125, %v153, %v155
      %v157 = vsel %vm127, %v153, %v156
      %159 = vst [vmem:[#allocation3] sm:$0xf] %v157
    $region21: #{spatial_attention2.1} parent=1 // pred_fallthru
      _
    %p160 = scmp.ne.s32.totalorder 0, 0
    // Predicated region
    $region22: #{spatial_attention2.1} parent=1 // pred_check
      %p161 = pneg %p160
    $region23: #{spatial_attention2.1} parent=1 // pred_check_branch
      %163 = sbr.rel (%p161) target = $region25
    $region24: #{spatial_attention2.1} parent=1 // pred_region
      %v164 = vld [vmem:[#allocation2] sm:$0xf]
      %v169 = vcombine.low %v42, %v49
      %v171 = vunpack.c.l.s4 1983009808
      %v172 = vunpack.c.0.s8 %v171
      %v173 = vlaneseq
      %v174 = vshrl.u32 %v173, 7
      %v175 = vsub.s32 %v172, %v174
      %v176 = vrot.slane %v169, %v175
      %v177 = vcombine.low %v56, %v63
      %v179 = vunpack.c.l.s4 1983009808
      %v180 = vunpack.c.0.s8 %v179
      %v181 = vlaneseq
      %v182 = vshrl.u32 %v181, 7
      %v183 = vsub.s32 %v180, %v182
      %v184 = vrot.slane %v177, %v183
      %vm185 = vcmask 1044484
      %v186 = vsel %vm185, %v176, %v176
      %vm187 = vcmask 1046534
      %v188 = vsel %vm187, %v176, %v186
      %v189 = vrot.slane %v184, 7
      %vm190 = vcmask 1041409
      %v191 = vsel %vm190, %v189, %v188
      %vm192 = vcmask 1043459
      %v193 = vsel %vm192, %v189, %v191
      %vm194 = vcmask 1045509
      %v195 = vsel %vm194, %v189, %v193
      %vm196 = vcmask 1047559
      %v197 = vsel %vm196, %v189, %v195
      %v199 = vadd.f32 %v164, %v197
      %200 = vst [vmem:[#allocation2] sm:$0xf] %v199
      %v201 = vld [vmem:[#allocation3] sm:$0xf]
      %v206 = vcombine.low %v70, %v77
      %v208 = vunpack.c.l.s4 1983009808
      %v209 = vunpack.c.0.s8 %v208
      %v210 = vlaneseq
      %v211 = vshrl.u32 %v210, 7
      %v212 = vsub.s32 %v209, %v211
      %v213 = vrot.slane %v206, %v212
      %v214 = vcombine.low %v84, %v91
      %v216 = vunpack.c.l.s4 1983009808
      %v217 = vunpack.c.0.s8 %v216
      %v218 = vlaneseq
      %v219 = vshrl.u32 %v218, 7
      %v220 = vsub.s32 %v217, %v219
      %v221 = vrot.slane %v214, %v220
      %v222 = vsel %vm185, %v213, %v213
      %v223 = vsel %vm187, %v213, %v222
      %v224 = vrot.slane %v221, 7
      %v225 = vsel %vm190, %v224, %v223
      %v226 = vsel %vm192, %v224, %v225
      %v227 = vsel %vm194, %v224, %v226
      %v228 = vsel %vm196, %v224, %v227
      %v230 = vmax.f32 %v201, %v228
      %231 = vst [vmem:[#allocation3] sm:$0xf] %v230
    $region25: #{spatial_attention2.1} parent=1 // pred_fallthru
      _
    // Predicated region
    $region26: #{spatial_attention2.1} parent=1 // pred_check
      %p232 = pneg %p92
    $region27: #{spatial_attention2.1} parent=1 // pred_check_branch
      %234 = sbr.rel (%p232) target = $region29
    $region28: #{spatial_attention2.1} parent=1 // pred_region
      %vm235 = vcmask 132096
      %236 = vst.msk [vmem:[#allocation4] sm:$0x3] %vm235, 0.0
      %vm237 = vcmask 271496
      %238 = vst.msk [vmem:[#allocation4 + $0x4] sm:$0x3] %vm237, 0.0
      %v239 = vld [vmem:[#allocation2] sm:$0xf]
      %241 = vrot.lane.b32.xlu0 %v239, 17
      %v242 = vpop.permute.xlu0 %241
      %v243 = vrot.slane %v242, 6
      %vm244 = vcmask 138240
      %v245 = vsel %vm244, %v243, %v242
      %vm247 = vcmask 1041544
      %vm248 = vcmask 1043458
      %vm249 = vmor %vm248, %vm247
      %vm250 = vcmask 136196
      %vm251 = vmor %vm250, %vm249
      %252 = vst.msk [vmem:[#allocation4] sm:$0x3f] %vm251, %v245
      %253 = vst.msk [vmem:[#allocation5] sm:$0x3] %vm235, 0.0
      %254 = vst.msk [vmem:[#allocation5 + $0x4] sm:$0x3] %vm237, 0.0
      %v255 = vld [vmem:[#allocation3] sm:$0xf]
      %257 = vrot.lane.b32.xlu0 %v255, 17
      %v258 = vpop.permute.xlu0 %257
      %v259 = vrot.slane %v258, 6
      %v260 = vsel %vm244, %v259, %v258
      %262 = vst.msk [vmem:[#allocation5] sm:$0x3f] %vm251, %v260
      %s263 = sld [smem:[#allocation6]]
      %v264 = vld [vmem:[#allocation4] sm:$0xf]
      %v265 = vstv %s263
      %v266 = vmul.f32 %v265, %v264
      %s267 = sld [smem:[#allocation6 + $0x9]]
      %v268 = vld [vmem:[#allocation5] sm:$0xf]
      %v269 = vstv %s267
      %v270 = vmul.f32 %v269, %v268
      %v271 = vadd.f32 %v266, %v270
      %s272 = sld [smem:[#allocation6 + $0x3]]
      %v273 = vld [vmem:[#allocation4] sm:$0x3f]
      %v274 = vstv %s272
      %v275 = vmul.f32 %v274, %v273
      %s276 = sld [smem:[#allocation6 + $0xc]]
      %v277 = vld [vmem:[#allocation5] sm:$0x3f]
      %v278 = vstv %s276
      %v279 = vmul.f32 %v278, %v277
      %v280 = vadd.f32 %v275, %v279
      %282 = vrot.lane.b32.xlu0 %v280, 112
      %v283 = vpop.permute.xlu0 %282
      %v284 = vrot.slane %v283, 2
      %vm285 = vcmask 916480
      %v286 = vsel %vm285, %v283, %v284
      %v288 = vadd.f32 %v271, %v286
      %s289 = sld [smem:[#allocation6 + $0x6]]
      %v290 = vstv %s289
      %v291 = vmul.f32 %v290, %v273
      %s292 = sld [smem:[#allocation6 + $0xf]]
      %v293 = vstv %s292
      %v294 = vmul.f32 %v293, %v277
      %v295 = vadd.f32 %v291, %v294
      %297 = vrot.lane.b32.xlu0 %v295, 96
      %v298 = vpop.permute.xlu0 %297
      %v299 = vrot.slane %v298, 2
      %vm300 = vcmask 785408
      %v301 = vsel %vm300, %v298, %v299
      %v303 = vadd.f32 %v288, %v301
      %v304 = vld [vmem:[%s1] ss:$4 sm:$0x3]
      %v306 = vlaneseq
      %v307 = vshrl.u32 %v306, 7
      %v308 = vsub.s32 0, %v307
      %v309 = vrot.slane %v304, %v308
      %v310 = vlaneseq
      %v311 = vshrl.u32 %v310, 7
      %v312 = vsub.s32 1, %v311
      %v313 = vrot.slane %v304, %v312
      %v314 = vcombine.low %v309, %v313
      %v316 = vunpack.c.l.s4 1983009808
      %v317 = vunpack.c.0.s8 %v316
      %v318 = vlaneseq
      %v319 = vshrl.u32 %v318, 7
      %v320 = vsub.s32 %v317, %v319
      %v321 = vrot.slane %v314, %v320
      %v323 = vmul.f32 %v303, %v321
      %s324 = sld [smem:[#allocation6 + $0x1]]
      %v325 = vld [vmem:[#allocation4] sm:$0x3f]
      %v326 = vstv %s324
      %v327 = vmul.f32 %v326, %v325
      %s328 = sld [smem:[#allocation6 + $0xa]]
      %v329 = vld [vmem:[#allocation5] sm:$0x3f]
      %v330 = vstv %s328
      %v331 = vmul.f32 %v330, %v329
      %v332 = vadd.f32 %v327, %v331
      %s333 = sld [smem:[#allocation6 + $0x4]]
      %v334 = vstv %s333
      %v335 = vmul.f32 %v334, %v325
      %s336 = sld [smem:[#allocation6 + $0xd]]
      %v337 = vstv %s336
      %v338 = vmul.f32 %v337, %v329
      %v339 = vadd.f32 %v335, %v338
      %341 = vrot.lane.b32.xlu0 %v339, 112
      %v342 = vpop.permute.xlu0 %341
      %v343 = vrot.slane %v342, 2
      %v344 = vsel %vm285, %v342, %v343
      %v346 = vadd.f32 %v332, %v344
      %s347 = sld [smem:[#allocation6 + $0x7]]
      %v348 = vstv %s347
      %v349 = vmul.f32 %v348, %v325
      %s350 = sld [smem:[#allocation6 + $0x10]]
      %v351 = vstv %s350
      %v352 = vmul.f32 %v351, %v329
      %v353 = vadd.f32 %v349, %v352
      %355 = vrot.lane.b32.xlu0 %v353, 96
      %v356 = vpop.permute.xlu0 %355
      %v357 = vrot.slane %v356, 2
      %v358 = vsel %vm300, %v356, %v357
      %v360 = vadd.f32 %v346, %v358
      %362 = vrot.lane.b32.xlu0 %v360, 127
      %v363 = vpop.permute.xlu0 %362
      %v364 = vrot.slane %v363, 2
      %vm365 = vcmask 1039360
      %v366 = vsel %vm365, %v363, %v364
      %v368 = vadd.f32 %v323, %v366
      %s369 = sld [smem:[#allocation6 + $0x2]]
      %v370 = vstv %s369
      %v371 = vmul.f32 %v370, %v325
      %s372 = sld [smem:[#allocation6 + $0xb]]
      %v373 = vstv %s372
      %v374 = vmul.f32 %v373, %v329
      %v375 = vadd.f32 %v371, %v374
      %s376 = sld [smem:[#allocation6 + $0x5]]
      %v377 = vstv %s376
      %v378 = vmul.f32 %v377, %v325
      %s379 = sld [smem:[#allocation6 + $0xe]]
      %v380 = vstv %s379
      %v381 = vmul.f32 %v380, %v329
      %v382 = vadd.f32 %v378, %v381
      %384 = vrot.lane.b32.xlu0 %v382, 112
      %v385 = vpop.permute.xlu0 %384
      %v386 = vrot.slane %v385, 2
      %v387 = vsel %vm285, %v385, %v386
      %v389 = vadd.f32 %v375, %v387
      %s390 = sld [smem:[#allocation6 + $0x8]]
      %v391 = vstv %s390
      %v392 = vmul.f32 %v391, %v325
      %s393 = sld [smem:[#allocation6 + $0x11]]
      %v394 = vstv %s393
      %v395 = vmul.f32 %v394, %v329
      %v396 = vadd.f32 %v392, %v395
      %398 = vrot.lane.b32.xlu0 %v396, 96
      %v399 = vpop.permute.xlu0 %398
      %v400 = vrot.slane %v399, 2
      %v401 = vsel %vm300, %v399, %v400
      %v403 = vadd.f32 %v389, %v401
      %s404 = scalar_lea.vmem %s1, 2
      %v405 = vld [vmem:[%s404] ss:$4 sm:$0x3]
      %v407 = vlaneseq
      %v408 = vshrl.u32 %v407, 7
      %v409 = vsub.s32 0, %v408
      %v410 = vrot.slane %v405, %v409
      %v411 = vlaneseq
      %v412 = vshrl.u32 %v411, 7
      %v413 = vsub.s32 1, %v412
      %v414 = vrot.slane %v405, %v413
      %v415 = vcombine.low %v410, %v414
      %v417 = vunpack.c.l.s4 1983009808
      %v418 = vunpack.c.0.s8 %v417
      %v419 = vlaneseq
      %v420 = vshrl.u32 %v419, 7
      %v421 = vsub.s32 %v418, %v420
      %v422 = vrot.slane %v415, %v421
      %423 = vrot.lane.b32.xlu0 %v422, 2
      %v424 = vpop.permute.xlu0 %423
      %v425 = vrot.slane %v424, 6
      %vm426 = vcmask 15360
      %v427 = vsel %vm426, %v425, %v424
      %v429 = vmul.f32 %v403, %v427
      %431 = vrot.lane.b32.xlu0 %v429, 126
      %v432 = vpop.permute.xlu0 %431
      %v433 = vrot.slane %v432, 2
      %vm434 = vcmask 1031168
      %v435 = vsel %vm434, %v432, %v433
      %v437 = vadd.f32 %v368, %v435
      %v438 = vxor.u32 %v437, 2147483648
      %v439 = vmul.f32 %v438, 1.442695
      %v440 = vpow.pop %v439
      %v441 = vadd.f32 %v440, 1.0
      %v442 = vrcp.pop %v441
      %v443 = vmul.f32 1.0, %v442
      %444 = vst [vmem:[%s3] sm:$0xf] %v443
    $region29: #{spatial_attention2.1} parent=1 // pred_fallthru
      _
    // Predicated region
    $region30: #{spatial_attention2.1} parent=1 // pred_check
      _
    $region31: #{spatial_attention2.1} parent=1 // pred_check_branch
      %446 = sbr.rel (0) target = $region33
    $region32: #{spatial_attention2.1} parent=1 // pred_region
      _
    $region33: #{spatial_attention2.1} parent=1 // pred_fallthru
      _
    // Predicated region
    $region34: #{spatial_attention2.1} parent=1 // pred_check
      _
    $region35: #{spatial_attention2.1} parent=1 // pred_check_branch
      %448 = sbr.rel (0) target = $region37
    $region36: #{spatial_attention2.1} parent=1 // pred_region
      _
    $region37: #{spatial_attention2.1} parent=1 // pred_fallthru
      _
    %449 = vsyncpa [#allocation7], 1

</llo_original>
